<compile_context>
chip_gen: v7x
topology: tpu7x:2x2x1
jax: 0.10.0
libtpu: 0.0.40
codegen_flags: <defaults>
</compile_context>

<pallas_src>
import math

import jax
import jax.numpy as jnp
from jax.experimental import pallas as pl
from jax.experimental.pallas import tpu as pltpu

_HALF_LOG_2PI = 0.5 * math.log(2.0 * math.pi)
_INV_SQRT2 = 1.0 / math.sqrt(2.0)

_LANE = 128
_SUBLANE = 8
_TARGET_N_STEPS = 8          # aim for >= ~8 batch grid steps (pipelining + megacore)


def _cdiv(a, b):
    return -(-a // b)


def _round_up(x, m):
    return _cdiv(x, m) * m


def _vmem_limits():
    """(tile_budget_bytes, vmem_limit_bytes), generation-aware with a safe fallback."""
    try:
        phys = int(pltpu.get_tpu_info().vmem_capacity_bytes)
    except Exception:
        phys = 64 * 1024 * 1024                       # conservative: v7x per-TC VMEM
    tile_budget = min(phys // 4, 28 * 1024 * 1024)    # 16 MiB on v7x, 28 MiB on v5e/v6e
    vmem_limit = min(phys * 3 // 8, 48 * 1024 * 1024)  # 24 MiB on v7x, 48 MiB on v5e/v6e
    return tile_budget, vmem_limit


def _choose_tiles(n, latent, obs, z_item, w_item, x_item, out_item, budget):
    """Pick (batch_tile, obs_tile) against the VMEM budget."""
    # --- obs tile: small decoders (obs <= 128, or W small) keep the full last
    # dim as the block (no padding, no tiling). Only when the double-buffered
    # resident W would eat more than half the budget do we add a D grid axis,
    # with lane-aligned column tiles.
    if obs <= _LANE or 2 * latent * obs * w_item <= budget // 2:
        td = obs
    else:
        cols = (budget // 2) // (2 * latent * w_item)
        td = max(_LANE, (cols // _LANE) * _LANE)
        td = min(td, _round_up(obs, _LANE))

    # --- batch tile: fill the remaining budget (z/x/out double-buffered).
    per_row = 2 * (latent * z_item + td * (x_item + out_item))
    resident = 2 * (latent * td * w_item + 3 * td * 4)   # W + scale(2,td) + b, f32, dbl-buffered
    avail = max(budget - resident, per_row * _SUBLANE)
    tn = max(_SUBLANE, (avail // per_row) // _SUBLANE * _SUBLANE)
    # Cap so the batch axis keeps several grid steps (v7x core sharding + pipelining).
    tn_cap = max(_SUBLANE, _round_up(_cdiv(n, _TARGET_N_STEPS), _SUBLANE))
    tn = int(min(tn, tn_cap, _round_up(n, _SUBLANE)))
    return tn, int(td)


def _gaussian_log_prob_kernel(z_ref, w_ref, b_ref, scale_ref, x_ref, out_ref):
    # Hoisted per-column constants (computed once in the wrapper, f32):
    #   row 0: exp(-log_sigma) / sqrt(2)        (0.5 folded into the scale)
    #   row 1: -log_sigma - 0.5 * log(2*pi)
    sc = scale_ref[...]                          # [2, TD] f32
    inv_scaled = sc[0:1, :]
    neg_const = sc[1:2, :]

    # forward(): affine decode on the MXU; f32 accumulation even for bf16 I/O.
    mu = jnp.dot(z_ref[...], w_ref[...], preferred_element_type=jnp.float32)
    mu = mu + b_ref[...]                         # [TN, TD] + [1, TD]

    # log_prob(): elementwise Normal(mu, sigma).log_prob(x), all math in f32.
    r = (x_ref[...].astype(jnp.float32) - mu) * inv_scaled
    out_ref[...] = (neg_const - r * r).astype(out_ref.dtype)


def gaussian_likelihood_log_prob(z, w, b, log_sigma, x, out_dtype=None):
    """Pallas TPU: elementwise Gaussian log-prob of x under Normal(z @ w + b, exp(log_sigma)).

    z: [N, L], w: [L, D], b: [1, D], log_sigma: [1, D], x: [N, D].
    z/w/x may be f32 or bf16 (bf16 halves HBM traffic; MXU still accumulates f32).
    """
    n, latent = z.shape
    latent_w, obs = w.shape
    assert latent_w == latent
    assert x.shape == (n, obs)
    assert b.shape == (1, obs) and log_sigma.shape == (1, obs)

    out_dtype = jnp.dtype(out_dtype if out_dtype is not None else x.dtype)

    # Tiny per-column params stay f32 (negligible traffic).
    b32 = b.astype(jnp.float32)
    ls32 = log_sigma.astype(jnp.float32)
    scale_const = jnp.concatenate(
        [jnp.exp(-ls32) * _INV_SQRT2, -ls32 - _HALF_LOG_2PI], axis=0)   # [2, D] f32

    z_item = jnp.dtype(z.dtype).itemsize
    w_item = jnp.dtype(w.dtype).itemsize
    x_item = jnp.dtype(x.dtype).itemsize
    out_item = out_dtype.itemsize

    tile_budget, vmem_limit = _vmem_limits()
    tn, td = _choose_tiles(n, latent, obs, z_item, w_item, x_item, out_item, tile_budget)

    grid = (pl.cdiv(n, tn), pl.cdiv(obs, td))

    cost = pl.CostEstimate(
        flops=2 * n * latent * obs + 5 * n * obs,
        transcendentals=0,
        bytes_accessed=(n * latent * z_item + latent * obs * w_item
                        + n * obs * (x_item + out_item) + 3 * obs * 4),
    )

    out = pl.pallas_call(
        _gaussian_log_prob_kernel,
        out_shape=jax.ShapeDtypeStruct((n, obs), out_dtype),
        grid_spec=pltpu.PrefetchScalarGridSpec(
            num_scalar_prefetch=0,
            grid=grid,
            in_specs=[
                pl.BlockSpec((tn, latent), lambda i, j: (i, 0)),   # z  (batch-tiled)
                pl.BlockSpec((latent, td), lambda i, j: (0, j)),   # W  (obs-tiled, VMEM-resident)
                pl.BlockSpec((1, td), lambda i, j: (0, j)),        # b
                pl.BlockSpec((2, td), lambda i, j: (0, j)),        # [inv_sigma/sqrt2 ; const]
                pl.BlockSpec((tn, td), lambda i, j: (i, j)),       # x  (batch-tiled)
            ],
            out_specs=pl.BlockSpec((tn, td), lambda i, j: (i, j)),
        ),
        compiler_params=pltpu.CompilerParams(
            dimension_semantics=("parallel", "parallel"),
            vmem_limit_bytes=int(vmem_limit),
        ),
        cost_estimate=cost,
    )(z, w, b32, scale_const, x)

    return out


def reference_log_prob(z, w, b, log_sigma, x):
    mu = z @ w + b
    sigma = jnp.exp(log_sigma)
    return -0.5 * ((x - mu) / sigma) ** 2 - log_sigma - _HALF_LOG_2PI


if __name__ == "__main__":
    # Small shapes: batch N=8, latent L=32, observation D=16.
    N, L, D = 8, 32, 16

    key = jax.random.PRNGKey(0)
    kz, kx, kw, kb = jax.random.split(key, 4)

    z32 = jax.random.normal(kz, (N, L), dtype=jnp.float32)
    x32 = jax.random.normal(kx, (N, D), dtype=jnp.float32)
    w32 = jax.random.normal(kw, (L, D), dtype=jnp.float32) * 0.1
    b = jax.random.normal(kb, (1, D), dtype=jnp.float32) * 0.01
    log_sigma = jnp.full((1, D), -0.5, dtype=jnp.float32)

    # TODO(synk): the base class `forward` is abstract; this script realizes it
    # as the affine-Gaussian decoder used by sgpvae's concrete likelihoods.

    # --- f32 I/O path: tight numerical check against the reference.
    out32 = jax.block_until_ready(
        gaussian_likelihood_log_prob(z32, w32, b, log_sigma, x32))
    ref32 = reference_log_prob(z32, w32, b, log_sigma, x32)
    assert out32.shape == (N, D) and out32.dtype == jnp.float32
    assert jnp.allclose(out32, ref32, atol=1e-5, rtol=1e-5), "f32 mismatch vs reference"

    # --- bf16 I/O path (production: ~2x less HBM traffic; f32 MXU accumulate
    # and f32 VPU math inside). Tolerance loosened for bf16 output rounding.
    zb = z32.astype(jnp.bfloat16)
    wb = w32.astype(jnp.bfloat16)
    xb = x32.astype(jnp.bfloat16)
    outb = jax.block_until_ready(
        gaussian_likelihood_log_prob(zb, wb, b, log_sigma, xb))
    refb = reference_log_prob(zb.astype(jnp.float32), wb.astype(jnp.float32),
                              b, log_sigma, xb.astype(jnp.float32))
    assert outb.shape == (N, D) and outb.dtype == jnp.bfloat16
    assert jnp.allclose(outb.astype(jnp.float32), refb, atol=3e-2, rtol=3e-2), \
        "bf16 mismatch vs reference"

    print("KERNEL_OK")
</pallas_src>

<mosaic_0001>
module attributes {stable_mosaic.version = 11 : i64} {
  func.func @_gaussian_log_prob_kernel(%arg0: i32, %arg1: i32, %arg2: memref<8x32xf32, #tpu.memory_space<vmem>>, %arg3: memref<32x16xf32, #tpu.memory_space<vmem>>, %arg4: memref<1x16xf32, #tpu.memory_space<vmem>>, %arg5: memref<2x16xf32, #tpu.memory_space<vmem>>, %arg6: memref<8x16xf32, #tpu.memory_space<vmem>>, %arg7: memref<8x16xf32, #tpu.memory_space<vmem>>) attributes {dimension_semantics = [#tpu.dimension_semantics<parallel>, #tpu.dimension_semantics<parallel>], iteration_bounds = array<i64: 1, 1>, scalar_prefetch = 0 : i64, scratch_operands = 0 : i64, tpu.core_type = #tpu.core_type<tc>, window_params = [{transform_indices = @transform_0, window_bounds = array<i64: 8, 32>}, {transform_indices = @transform_1, window_bounds = array<i64: 32, 16>}, {transform_indices = @transform_2, window_bounds = array<i64: 1, 16>}, {transform_indices = @transform_3, window_bounds = array<i64: 2, 16>}, {transform_indices = @transform_4, window_bounds = array<i64: 8, 16>}, {transform_indices = @transform_5, window_bounds = array<i64: 8, 16>}]} {
    %c0 = arith.constant 0 : index
    %c0_0 = arith.constant 0 : index
    %0 = vector.load %arg5[%c0, %c0_0] : memref<2x16xf32, #tpu.memory_space<vmem>>, vector<2x16xf32>
    %1 = vector.extract_strided_slice %0 {offsets = [0, 0], sizes = [1, 16], strides = [1, 1]} : vector<2x16xf32> to vector<1x16xf32>
    %2 = vector.extract_strided_slice %0 {offsets = [1, 0], sizes = [1, 16], strides = [1, 1]} : vector<2x16xf32> to vector<1x16xf32>
    %c0_1 = arith.constant 0 : index
    %c0_2 = arith.constant 0 : index
    %3 = vector.load %arg2[%c0_1, %c0_2] : memref<8x32xf32, #tpu.memory_space<vmem>>, vector<8x32xf32>
    %c0_3 = arith.constant 0 : index
    %c0_4 = arith.constant 0 : index
    %4 = vector.load %arg3[%c0_3, %c0_4] : memref<32x16xf32, #tpu.memory_space<vmem>>, vector<32x16xf32>
    %cst = arith.constant dense<0.000000e+00> : vector<8x16xf32>
    %5 = tpu.matmul %3, %4, %cst {dimension_numbers = #tpu.dot_dimension_numbers<[1], [0], [0], [1], [0, 0, 1, 1], [], []>} : vector<8x32xf32>, vector<32x16xf32>, vector<8x16xf32> -> vector<8x16xf32>
    %c0_5 = arith.constant 0 : index
    %c0_6 = arith.constant 0 : index
    %6 = vector.load %arg4[%c0_5, %c0_6] : memref<1x16xf32, #tpu.memory_space<vmem>>, vector<1x16xf32>
    %7 = vector.broadcast %6 : vector<1x16xf32> to vector<8x16xf32>
    %8 = arith.addf %5, %7 : vector<8x16xf32>
    %c0_7 = arith.constant 0 : index
    %c0_8 = arith.constant 0 : index
    %9 = vector.load %arg6[%c0_7, %c0_8] : memref<8x16xf32, #tpu.memory_space<vmem>>, vector<8x16xf32>
    %10 = arith.subf %9, %8 : vector<8x16xf32>
    %11 = vector.broadcast %1 : vector<1x16xf32> to vector<8x16xf32>
    %12 = arith.mulf %10, %11 : vector<8x16xf32>
    %13 = arith.mulf %12, %12 : vector<8x16xf32>
    %14 = vector.broadcast %2 : vector<1x16xf32> to vector<8x16xf32>
    %15 = arith.subf %14, %13 : vector<8x16xf32>
    %c0_9 = arith.constant 0 : index
    %c0_10 = arith.constant 0 : index
    %16 = vector.load %arg7[%c0_9, %c0_10] : memref<8x16xf32, #tpu.memory_space<vmem>>, vector<8x16xf32>
    tpu.vector_store %arg7[%c0_9, %c0_10], %15 {strides = array<i32>} : memref<8x16xf32, #tpu.memory_space<vmem>>, vector<8x16xf32>,
    return
  }
  func.func @transform_0(%arg0: i32, %arg1: i32) -> (i32, i32) {
    %c0_i32 = arith.constant 0 : i32
    %c0_i32_0 = arith.constant 0 : i32
    return %arg0, %c0_i32 : i32, i32
  }
  func.func @transform_1(%arg0: i32, %arg1: i32) -> (i32, i32) {
    %c0_i32 = arith.constant 0 : i32
    %c0_i32_0 = arith.constant 0 : i32
    return %c0_i32, %arg1 : i32, i32
  }
  func.func @transform_2(%arg0: i32, %arg1: i32) -> (i32, i32) {
    %c0_i32 = arith.constant 0 : i32
    %c0_i32_0 = arith.constant 0 : i32
    return %c0_i32, %arg1 : i32, i32
  }
  func.func @transform_3(%arg0: i32, %arg1: i32) -> (i32, i32) {
    %c0_i32 = arith.constant 0 : i32
    %c0_i32_0 = arith.constant 0 : i32
    return %c0_i32, %arg1 : i32, i32
  }
  func.func @transform_4(%arg0: i32, %arg1: i32) -> (i32, i32) {
    %c0_i32 = arith.constant 0 : i32
    return %arg0, %arg1 : i32, i32
  }
  func.func @transform_5(%arg0: i32, %arg1: i32) -> (i32, i32) {
    %c0_i32 = arith.constant 0 : i32
    return %arg0, %arg1 : i32, i32
  }
}

</mosaic_0001>

<llo_original>
// kernel: tpu_custom_call.1
$region0: #{tpu_custom_call.1}
  #allocation0 [shape = 'u32[]', space=smem, size = 0x4, offset = 0x4, fixed_abs, tag = 'smem constant byte address 0x4 - core index']
  #allocation1 [shape = 'u32[144,128]{1,0:T(1,128)}', space=vmem, size = 0x12000, scoped, tag = 'internal scratch']
  %s0 = inlined_call_operand.vmem [shape: f32[8,32], index: 0, kind: input, shape index: {}]
  %s1 = inlined_call_operand.vmem [shape: f32[32,16], index: 1, kind: input, shape index: {}]
  %s2 = inlined_call_operand.vmem [shape: f32[1,16], index: 2, kind: input, shape index: {}]
  %s3 = inlined_call_operand.vmem [shape: f32[2,16], index: 3, kind: input, shape index: {}]
  %s4 = inlined_call_operand.vmem [shape: f32[8,16], index: 4, kind: input, shape index: {}]
  %s5 = inlined_call_operand.hbm [shape: f32[8,16], index: 5, kind: output, shape index: {}]
  %s6 = sld [smem:[#allocation0]]
  $region30: #{tpu_custom_call.1} parent=0
    _
  %s8 = ssub.s32 1, %s6
  %s9 = scalar_select 0, %s8, %s6
  $region1: #{tpu_custom_call.1} parent=0
    #allocation2 [shape = 'u8[4096]{0}', space=vmem, size = 0x1000, scoped, tag = 'output window, operand 0, single buffered']
    #allocation3 [shape = 's32[1]{0}', space=sflag, size = 0x4, scoped, tag = 'scoped memory for tpu_custom_call.1']
    %10 = vsyncpa [#allocation3], 0
    // Predicated region
    $region2: #{tpu_custom_call.1} parent=1 // pred_check
      _
    $region3: #{tpu_custom_call.1} parent=1 // pred_check_branch
      %12 = sbr.rel (0) target = $region5
    $region4: #{tpu_custom_call.1} parent=1 // pred_region
      _
    $region5: #{tpu_custom_call.1} parent=1 // pred_fallthru
      _
    // Predicated region
    $region6: #{tpu_custom_call.1} parent=1 // pred_check
      _
    $region7: #{tpu_custom_call.1} parent=1 // pred_check_branch
      %14 = sbr.rel (0) target = $region9
    $region8: #{tpu_custom_call.1} parent=1 // pred_region
      _
    $region9: #{tpu_custom_call.1} parent=1 // pred_fallthru
      _
    // Predicated region
    $region10: #{tpu_custom_call.1} parent=1 // pred_check
      _
    $region11: #{tpu_custom_call.1} parent=1 // pred_check_branch
      %16 = sbr.rel (0) target = $region13
    $region12: #{tpu_custom_call.1} parent=1 // pred_region
      _
    $region13: #{tpu_custom_call.1} parent=1 // pred_fallthru
      _
    // Predicated region
    $region14: #{tpu_custom_call.1} parent=1 // pred_check
      _
    $region15: #{tpu_custom_call.1} parent=1 // pred_check_branch
      %18 = sbr.rel (0) target = $region17
    $region16: #{tpu_custom_call.1} parent=1 // pred_region
      _
    $region17: #{tpu_custom_call.1} parent=1 // pred_fallthru
      _
    // Predicated region
    $region18: #{tpu_custom_call.1} parent=1 // pred_check
      _
    $region19: #{tpu_custom_call.1} parent=1 // pred_check_branch
      %20 = sbr.rel (0) target = $region21
    $region20: #{tpu_custom_call.1} parent=1 // pred_region
      _
    $region21: #{tpu_custom_call.1} parent=1 // pred_fallthru
      _
    %v21 = vld [vmem:[%s3] sm:$0x3]
    %v22 = vld [vmem:[%s0] sm:$0xff]
    %v23 = vld [vmem:[%s1] sm:$0xff]
    %v24 = vld [vmem:[%s1 + $0x8] sm:$0xff]
    %v25 = vld [vmem:[%s1 + $0x10] sm:$0xff]
    %v26 = vld [vmem:[%s1 + $0x18] sm:$0xff]
    %v27 = vld [vmem:[%s2] sm:$0x1]
    %v29 = vlaneseq
    %v30 = vshrl.u32 %v29, 7
    %v31 = vsub.s32 0, %v30
    %v32 = vrot.slane %v27, %v31
    %vm34 = vcmask 261120
    %v36 = vsel %vm34, %v22, 0
    %38 = vmatprep.subr.mxu0 0.0
    %39 = vmatpush1.msra.mxu0 %v23
    %40 = vmatprep.subr.mxu0 0.0
    %41 = vmatpush1.msra.mxu0 %v24
    %42 = vmatprep.subr.mxu0 0.0
    %43 = vmatpush1.msra.mxu0 %v25
    %44 = vmatprep.subr.mxu0 0.0
    %45 = vmatpush1.msra.mxu0 %v26
    %46 = vmatprep.subr.mxu0 0.0
    %47 = vmatpush1.msra.mxu0 0.0
    %48 = vmatprep.subr.mxu0 0.0
    %49 = vmatpush1.msra.mxu0 0.0
    %50 = vmatprep.subr.mxu0 0.0
    %51 = vmatpush1.msra.mxu0 0.0
    %52 = vmatprep.subr.mxu0 0.0
    %53 = vmatpush1.msra.mxu0 0.0
    %54 = vmatprep.subr.mxu0 0.0
    %55 = vmatpush1.msra.mxu0 0.0
    %56 = vmatprep.subr.mxu0 0.0
    %57 = vmatpush1.msra.mxu0 0.0
    %58 = vmatprep.subr.mxu0 0.0
    %59 = vmatpush1.msra.mxu0 0.0
    %60 = vmatprep.subr.mxu0 0.0
    %61 = vmatpush1.msra.mxu0 0.0
    %62 = vmatprep.subr.mxu0 0.0
    %63 = vmatpush1.msra.mxu0 0.0
    %64 = vmatprep.subr.mxu0 0.0
    %65 = vmatpush1.msra.mxu0 0.0
    %66 = vmatprep.subr.mxu0 0.0
    %67 = vmatpush1.msra.mxu0 0.0
    %68 = vmatprep.subr.mxu0 0.0
    %69 = vmatpush1.msra.mxu0 0.0
    %70 = vmatprep.subr.mxu0 0.0
    %71 = vmatpush1.msra.mxu0 0.0
    %72 = vmatprep.subr.mxu0 0.0
    %73 = vmatpush1.msra.mxu0 0.0
    %74 = vmatprep.subr.mxu0 0.0
    %75 = vmatpush1.msra.mxu0 0.0
    %76 = vmatprep.subr.mxu0 0.0
    %77 = vmatpush1.msra.mxu0 0.0
    %78 = vmatprep.subr.mxu0 0.0
    %79 = vmatpush1.msra.mxu0 0.0
    %80 = vmatprep.subr.mxu0 0.0
    %81 = vmatpush1.msra.mxu0 0.0
    %82 = vmatprep.subr.mxu0 0.0
    %83 = vmatpush1.msra.mxu0 0.0
    %84 = vmatprep.subr.mxu0 0.0
    %85 = vmatpush1.msra.mxu0 0.0
    %86 = vmatprep.subr.mxu0 0.0
    %87 = vmatpush1.msra.mxu0 0.0
    %88 = vmatprep.subr.mxu0 0.0
    %89 = vmatpush1.msra.mxu0 0.0
    %90 = vmatprep.subr.mxu0 0.0
    %91 = vmatpush1.msra.mxu0 0.0
    %92 = vmatprep.subr.mxu0 0.0
    %93 = vmatpush1.msra.mxu0 0.0
    %94 = vmatprep.subr.mxu0 0.0
    %95 = vmatpush1.msra.mxu0 0.0
    %96 = vmatprep.subr.mxu0 0.0
    %97 = vmatpush1.msra.mxu0 0.0
    %98 = vmatprep.subr.mxu0 0.0
    %99 = vmatpush1.msra.mxu0 0.0
    %100 = vmatprep.subr.mxu0 0.0
    %101 = vmatpush1.msra.mxu0 0.0
    %102 = vmatprep.mubr.f32.mxu0 0.0
    %103 = vmatmul.mubr.f32.gmra.mrb[0].mxu0 %v36
    %v104 = vpop.f32.mrb[0].mxu0
    %v105 = vadd.f32 %v32, %v104
    %v106 = vpop.f32.mrb[0].mxu0
    %107 = vdwg.mxu0
    %v108 = vld [vmem:[%s4] sm:$0xff]
    %v109 = vsub.f32 %v108, %v105
    %v110 = vlaneseq
    %v111 = vshrl.u32 %v110, 7
    %v112 = vsub.s32 0, %v111
    %v113 = vrot.slane %v21, %v112
    %v114 = vmul.f32 %v109, %v113
    %v115 = vmul.f32 %v114, %v114
    %v116 = vlaneseq
    %v117 = vshrl.u32 %v116, 7
    %v118 = vsub.s32 1, %v117
    %v119 = vrot.slane %v21, %v118
    %v120 = vsub.f32 %v119, %v115
    %vm121 = vcmask 130048
    %122 = vst.msk [vmem:[#allocation2] sm:$0xff] %vm121, %v120
    // Predicated region
    $region22: #{tpu_custom_call.1} parent=1 // pred_check
      _
    $region23: #{tpu_custom_call.1} parent=1 // pred_check_branch
      %124 = sbr.rel (0) target = $region25
    $region24: #{tpu_custom_call.1} parent=1 // pred_region
      %s126 = ssub.s32 128, 128
      %127 = vsyncadd [#allocation3], %s126
      %s129 = sshll.u32 [#allocation2], 4
      %s130 = int_to_ptr.vmem [resolvable:$true] %s129
      %132 = dma.vmem_to_hbm [thread:$0]  %s130, 128, %s5, [#allocation3]
    $region25: #{tpu_custom_call.1} parent=1 // pred_fallthru
      _
    // Predicated region
    $region26: #{tpu_custom_call.1} parent=1 // pred_check
      _
    $region27: #{tpu_custom_call.1} parent=1 // pred_check_branch
      %134 = sbr.rel (0) target = $region29
    $region28: #{tpu_custom_call.1} parent=1 // pred_region
      %135 = dma.done [#allocation3], 128
    $region29: #{tpu_custom_call.1} parent=1 // pred_fallthru
      _
    %136 = vsyncpa [#allocation3], 1

</llo_original>
